<compile_context>
chip_gen: v7x
topology: tpu7x:2x2x1
jax: 0.10.0
libtpu: 0.0.40
codegen_flags: <defaults>
</compile_context>

<pallas_src>
import jax
import jax.numpy as jnp
from jax.experimental import pallas as pl
from jax.experimental.pallas import tpu as pltpu

_LANE = 128                       # TPU lane width (last-dim tile)
_SUBLANE = 16                     # sublane multiple safe for f32 (8) and bf16 (16)
_BN_EPS = 1e-5
_TARGET_TILE_ROWS = 1024          # 512-1024 rows ~ HBM roofline + full MXU fill

_VMEM_CFG = None                  # (vmem_limit_bytes, tile-sizing budget), lazily set


def _round_up(x, m):
    return ((x + m - 1) // m) * m


def _vmem_config():
    """Generation-aware VMEM limits: big budgets on 128 MiB parts (v5e/v6e),
    conservative on v7x's 64 MiB (also the fallback if the query fails)."""
    global _VMEM_CFG
    if _VMEM_CFG is None:
        phys = 64 * 1024 * 1024
        try:
            phys = int(getattr(pltpu.get_tpu_info(), "vmem_capacity_bytes", phys))
        except Exception:
            pass
        if phys >= 100 * 1024 * 1024:        # v5e / v6e: 128 MiB physical VMEM
            _VMEM_CFG = (96 * 1024 * 1024, 64 * 1024 * 1024)
        else:                                # v7x (64 MiB) or unknown
            _VMEM_CFG = (48 * 1024 * 1024, 32 * 1024 * 1024)
    return _VMEM_CFG


# ----------------------- plain-JAX glue (sampling / grouping) -----------------------

def square_distance(src, dst):
    # src [B,N,C], dst [B,M,C] -> [B,N,M]
    return jnp.sum((src[:, :, None, :] - dst[:, None, :, :]) ** 2, axis=-1)


def farthest_point_sample(xyz, npoint, key):
    # xyz [B,N,3] -> [B,npoint] int32   (torch.randint seed replaced by PRNGKey)
    B, N, _ = xyz.shape
    farthest = jax.random.randint(key, (B,), 0, N, dtype=jnp.int32)
    distance = jnp.full((B, N), 1e10, dtype=jnp.float32)
    centroids = jnp.zeros((B, npoint), dtype=jnp.int32)
    batch_idx = jnp.arange(B)

    def body(i, carry):
        centroids, distance, farthest = carry
        centroids = centroids.at[:, i].set(farthest)
        centroid = xyz[batch_idx, farthest][:, None, :]              # [B,1,3]
        dist = jnp.sum((xyz - centroid) ** 2, axis=-1)               # [B,N]
        distance = jnp.minimum(distance, dist)
        farthest = jnp.argmax(distance, axis=-1).astype(jnp.int32)
        return centroids, distance, farthest

    centroids, _, _ = jax.lax.fori_loop(
        0, npoint, body, (centroids, distance, farthest))
    return centroids


def index_points(points, idx):
    # points [B,N,C], idx [B,...] -> [B,...,C]
    B = points.shape[0]
    flat = idx.reshape(B, -1)
    gathered = jnp.take_along_axis(points, flat[..., None], axis=1)
    return gathered.reshape(*idx.shape, points.shape[-1])


def query_ball_point(radius, nsample, xyz, new_xyz):
    # xyz [B,N,3], new_xyz [B,S,3] -> group_idx [B,S,nsample] int32
    B, N, _ = xyz.shape
    S = new_xyz.shape[1]
    sqrdists = square_distance(new_xyz, xyz)                         # [B,S,N]
    group_idx = jnp.broadcast_to(jnp.arange(N, dtype=jnp.int32), (B, S, N))
    group_idx = jnp.where(sqrdists > radius ** 2, N, group_idx)
    group_idx = jnp.sort(group_idx, axis=-1)[:, :, :nsample]
    group_first = jnp.broadcast_to(group_idx[:, :, :1], (B, S, nsample))
    group_idx = jnp.where(group_idx == N, group_first, group_idx)
    return group_idx


# ----------------------------- Pallas hot-path kernels -------------------------------

def _make_matmul_stats_kernel(first_layer, bs_valid, bs_pad, tile_rows):
    """One shared-MLP layer: (optionally) apply the previous layer's folded BN
    scale/shift + ReLU, run the 1x1-conv matmul on the MXU (bf16 in, f32 acc),
    write the pre-BN activation z as bf16, and emit per-tile (masked sum,
    masked tile-mean-centered sum of squares) in f32 so the wrapper can finish
    exact, cancellation-safe BatchNorm statistics across tiles."""
    need_mask = bs_pad != bs_valid

    def kernel(*refs):
        if first_layer:
            x_ref, w_ref, z_ref, stats_ref = refs
            h = x_ref[...]                                   # already bf16
        else:
            x_ref, act_ref, w_ref, z_ref, stats_ref = refs
            scale = act_ref[0:1, :]                          # gamma * rsqrt(var+eps)
            shift = act_ref[1:2, :]                          # beta  - mean * scale
            h = jnp.maximum(x_ref[...].astype(jnp.float32) * scale + shift,
                            0.0).astype(jnp.bfloat16)
        z = jnp.dot(h, w_ref[...], preferred_element_type=jnp.float32)
        z_ref[...] = z.astype(jnp.bfloat16)                  # bf16 inter-layer act

        # --- BN statistics (f32, padded (b,s) rows masked out) ---
        if need_mask:
            base = (pl.program_id(0) * tile_rows) % bs_pad   # offset inside k-slab
            rid = base + jax.lax.broadcasted_iota(jnp.int32, (tile_rows, 1), 0)
            valid = rid < bs_valid
            zm = jnp.where(valid, z, 0.0)
            n_t = jnp.clip(bs_valid - base, 0, tile_rows).astype(jnp.float32)
        else:
            zm = z
            n_t = jnp.float32(tile_rows)
        s1 = jnp.sum(zm, axis=0, keepdims=True)              # (1, Cout_pad)
        m_t = s1 / jnp.maximum(n_t, 1.0)                     # per-tile mean
        d = zm - m_t
        if need_mask:
            d = jnp.where(valid, d, 0.0)
        s2c = jnp.sum(d * d, axis=0, keepdims=True)          # centered sum of squares
        stats_ref[...] = jnp.concatenate([s1, s2c], axis=0)[None]

    return kernel


def _matmul_stats_call(x2d, act, w_pad, *, first_layer, tile_rows, bs_valid,
                       bs_pad, vmem_limit):
    rows, cin_p = x2d.shape
    cout_p = w_pad.shape[1]
    n_tiles = rows // tile_rows

    in_specs = [pl.BlockSpec((tile_rows, cin_p), lambda i: (i, 0))]
    args = [x2d]
    if not first_layer:
        in_specs.append(pl.BlockSpec((2, cin_p), lambda i: (0, 0)))
        args.append(act)
    in_specs.append(pl.BlockSpec((cin_p, cout_p), lambda i: (0, 0)))
    args.append(w_pad)

    z, stats = pl.pallas_call(
        _make_matmul_stats_kernel(first_layer, bs_valid, bs_pad, tile_rows),
        out_shape=(jax.ShapeDtypeStruct((rows, cout_p), jnp.bfloat16),
                   jax.ShapeDtypeStruct((n_tiles, 2, cout_p), jnp.float32)),
        grid=(n_tiles,),
        in_specs=in_specs,
        out_specs=(pl.BlockSpec((tile_rows, cout_p), lambda i: (i, 0)),
                   pl.BlockSpec((1, 2, cout_p), lambda i: (i, 0, 0))),
        compiler_params=pltpu.CompilerParams(
            dimension_semantics=("parallel",),
            vmem_limit_bytes=vmem_limit),
    )(*args)
    return z, stats


def _relu_max_kernel(z_ref, act_ref, o_ref):
    """Last layer's folded BN + ReLU and a running max over the K grid axis.
    The output block has the same index for every k, so it stays resident in
    VMEM across the K sweep and acts as the accumulator (P3 pattern)."""
    k = pl.program_id(1)
    scale = act_ref[0:1, :]
    shift = act_ref[1:2, :]
    cur = jnp.maximum(z_ref[...].astype(jnp.float32) * scale + shift, 0.0)

    @pl.when(k == 0)
    def _():
        o_ref[...] = cur

    @pl.when(k > 0)
    def _():
        o_ref[...] = jnp.maximum(o_ref[...], cur)


def _relu_max_call(z2d, act, *, k_neighbors, bs_pad, tile_rows, vmem_limit):
    # z2d: (K * bs_pad, Cout_pad) bf16, rows ordered with k slowest.
    cout_p = z2d.shape[-1]
    blocks_per_slab = bs_pad // tile_rows
    return pl.pallas_call(
        _relu_max_kernel,
        out_shape=jax.ShapeDtypeStruct((bs_pad, cout_p), jnp.float32),
        grid=(blocks_per_slab, k_neighbors),
        in_specs=[pl.BlockSpec((tile_rows, cout_p),
                               lambda i, k: (k * blocks_per_slab + i, 0)),
                  pl.BlockSpec((2, cout_p), lambda i, k: (0, 0))],
        out_specs=pl.BlockSpec((tile_rows, cout_p), lambda i, k: (i, 0)),
        compiler_params=pltpu.CompilerParams(
            dimension_semantics=("parallel", "arbitrary"),
            vmem_limit_bytes=vmem_limit),
    )(z2d, act)


def _pick_tile(bs, cin_pad_max, cout_pad_max, vmem_budget):
    """Row-tile shared by the layer kernels and the relu-max kernel, sized from
    their own per-row footprints (double-buffered blocks) against the
    generation-aware VMEM budget, targeting 512-1024 rows."""
    per_row = max(4 * (cin_pad_max + cout_pad_max),   # layer kernel: x bf16 + z bf16, x2 buffers
                  12 * cout_pad_max)                  # max kernel: z bf16 x2 + out f32 x2
    fixed = 4 * cin_pad_max * cout_pad_max + (1 << 16)  # weight (bf16, x2) + act/stats slack
    cap = max(_SUBLANE, ((vmem_budget - fixed) // per_row) // _SUBLANE * _SUBLANE)
    return max(_SUBLANE, min(_TARGET_TILE_ROWS, cap, _round_up(bs, _SUBLANE)))


def shared_mlp_max_pallas(grouped_kbsc, kernel_layers, eps=_BN_EPS):
    """grouped_kbsc: [K, B, S, Cin_real] f32 (K-major layout straight from the
    gather, so no full-tensor transpose here); kernel_layers: list of
    (W_pad bf16 [Cin_pad, Cout_pad], gamma_pad f32, beta_pad f32, cout_real).
    Computes Conv2d(1x1) + BatchNorm2d(training mode, biased variance over all
    B*S*K positions) + ReLU per layer, then max over K.  Returns [B, S, Cout]."""
    K, B, S, cin = grouped_kbsc.shape
    BS = B * S
    cin_pad = kernel_layers[0][0].shape[0]
    c_in_max = max(w.shape[0] for w, *_ in kernel_layers)
    c_out_max = max(w.shape[1] for w, *_ in kernel_layers)
    vmem_limit, vmem_budget = _vmem_config()
    tile = _pick_tile(BS, c_in_max, c_out_max, vmem_budget)
    bs_pad = _round_up(BS, tile)          # tile | bs_pad -> tiles never straddle k-slabs
    n_valid = BS * K

    # Layout plumbing in the wrapper (no big transpose): pad the (b*s) axis to
    # bs_pad and channels to a lane-dense multiple of 128, cast to bf16.
    x = grouped_kbsc.reshape(K, BS, cin)
    x = jnp.pad(x, ((0, 0), (0, bs_pad - BS), (0, cin_pad - cin)))
    h2d = x.reshape(K * bs_pad, cin_pad).astype(jnp.bfloat16)

    n_tiles = (K * bs_pad) // tile
    # Static per-tile valid-row counts for the Chan/Welford cross-tile combine.
    n_t = jnp.asarray(
        [max(0, min(tile, BS - ((t * tile) % bs_pad))) for t in range(n_tiles)],
        jnp.float32)

    act = None
    for li, (w_pad, gamma_pad, beta_pad, _) in enumerate(kernel_layers):
        z, stats = _matmul_stats_call(
            h2d, act, w_pad, first_layer=(li == 0), tile_rows=tile,
            bs_valid=BS, bs_pad=bs_pad, vmem_limit=vmem_limit)
        # Finish BN stats across tiles with the parallel-variance (Chan) combine:
        # no E[x^2]-E[x]^2 cancellation.  Then fold gamma/beta into one
        # per-channel scale/shift applied inside the next kernel.
        s1 = stats[:, 0, :]                                   # (n_tiles, Cout_pad)
        s2c = stats[:, 1, :]
        mean = jnp.sum(s1, axis=0) / n_valid
        m_t = s1 / jnp.maximum(n_t, 1.0)[:, None]
        m2 = jnp.sum(s2c, axis=0) + jnp.sum(
            n_t[:, None] * (m_t - mean[None, :]) ** 2, axis=0)
        var = jnp.maximum(m2 / n_valid, 0.0)
        scale = gamma_pad * jax.lax.rsqrt(var + eps)
        shift = beta_pad - mean * scale
        act = jnp.stack([scale, shift], axis=0)               # (2, Cout_pad)
        h2d = z                                               # bf16 pre-BN acts

    cout_real = kernel_layers[-1][3]
    out = _relu_max_call(h2d, act, k_neighbors=K, bs_pad=bs_pad,
                         tile_rows=tile, vmem_limit=vmem_limit)
    return out[:BS, :cout_real].reshape(B, S, cout_real)


# --------------------------- parameter packing helpers --------------------------------

def _pad_layers(layers):
    """Pad real (W, b, gamma, beta) to lane-dense (multiple-of-128) channel dims.
    W is stored bf16 for the MXU; gamma/beta stay f32 and are zero on padded
    channels so those stay exactly zero through BN + ReLU.  The conv bias is
    dropped: the following training-mode BatchNorm cancels it exactly."""
    out = []
    for w, _b, gamma, beta in layers:
        cin, cout = w.shape
        cin_p, cout_p = _round_up(cin, _LANE), _round_up(cout, _LANE)
        w_pad = jnp.zeros((cin_p, cout_p), jnp.float32).at[:cin, :cout].set(w)
        g_pad = jnp.zeros((cout_p,), jnp.float32).at[:cout].set(gamma.reshape(-1))
        bt_pad = jnp.zeros((cout_p,), jnp.float32).at[:cout].set(beta.reshape(-1))
        out.append((w_pad.astype(jnp.bfloat16), g_pad, bt_pad, cout))
    return out


def _block_diag(mats):
    rows = sum(m.shape[0] for m in mats)
    cols = sum(m.shape[1] for m in mats)
    out = jnp.zeros((rows, cols), mats[0].dtype)
    r = c = 0
    for m in mats:
        out = out.at[r:r + m.shape[0], c:c + m.shape[1]].set(m)
        r += m.shape[0]
        c += m.shape[1]
    return out


def _fuse_branch_layers(branch_layers):
    """Fuse per-radius MSG branches into one MLP stack: block-diagonal weights,
    concatenated bias/gamma/beta.  One kernel chain then serves all branches."""
    n_layers = len(branch_layers[0])
    fused = []
    for l in range(n_layers):
        ws = [bl[l][0] for bl in branch_layers]
        bs = [bl[l][1].reshape(-1) for bl in branch_layers]
        gs = [bl[l][2].reshape(-1) for bl in branch_layers]
        bts = [bl[l][3].reshape(-1) for bl in branch_layers]
        fused.append((_block_diag(ws), jnp.concatenate(bs),
                      jnp.concatenate(gs), jnp.concatenate(bts)))
    return fused


def _ref_shared_mlp_max(grouped_kbsc, layers, eps=_BN_EPS):
    """Pure-JAX reference with the PyTorch semantics (Conv2d 1x1 with bias, then
    BatchNorm2d training mode with biased variance, ReLU, max over K)."""
    K, B, S, C = grouped_kbsc.shape
    h = grouped_kbsc.reshape(K * B * S, C)
    for w, b, gamma, beta in layers:
        z = jnp.dot(h.astype(jnp.bfloat16), w.astype(jnp.bfloat16),
                    preferred_element_type=jnp.float32) + b.reshape(1, -1)
        mean = jnp.mean(z, axis=0, keepdims=True)
        var = jnp.mean((z - mean) ** 2, axis=0, keepdims=True)
        h = jnp.maximum((z - mean) * jax.lax.rsqrt(var + eps) * gamma.reshape(1, -1)
                        + beta.reshape(1, -1), 0.0)
    return jnp.max(h.reshape(K, B * S, -1), axis=0).reshape(B, S, -1)


# ------------------------------- module equivalent -----------------------------------

class PointNetSetAbstractionMsgPallas:
    """Multi-scale-group PointNet++ set abstraction (the TransitionDown /
    PointNetSetAbstraction hot path of PointTransformerEncoder).  Sampling and
    grouping stay in plain JAX; the shared MLP + BN(train) + ReLU + max stack
    runs in Pallas.  With a single radius (or knn=True) this reduces exactly to
    the spec's PointNetSetAbstraction."""

    def __init__(self, npoint, radius_list, nsample_list, in_channel, mlp_list,
                 key, knn=False):
        self.npoint = npoint
        self.radius_list = list(radius_list)
        self.nsample_list = list(nsample_list)
        self.knn = knn
        self.out_channels = sum(m[-1] for m in mlp_list)

        # Deterministic synthetic parameter init (Conv2d 1x1 weight [out,in,1,1]
        # is stored transposed as (in, out) for the channels-last matmul form).
        self.params = []
        for mlp in mlp_list:
            last = in_channel + 3
            layers = []
            for out_c in mlp:
                key, k1, k2, k3, k4 = jax.random.split(key, 5)
                w = jax.random.normal(k1, (last, out_c), jnp.float32) / jnp.sqrt(
                    jnp.float32(last))
                b = 0.01 * jax.random.normal(k2, (out_c,), jnp.float32)
                gamma = 1.0 + 0.1 * jax.random.normal(k3, (out_c,), jnp.float32)
                beta = 0.1 * jax.random.normal(k4, (out_c,), jnp.float32)
                layers.append((w, b, gamma, beta))
                last = out_c
            self.params.append(layers)

        # Branch fusion when every branch shares K and MLP depth: one fused,
        # lane-dense kernel chain instead of one per branch (right call for
        # small channels where launch overhead dominates; wide branches should
        # use a branch grid axis instead — see TODO at top of file).
        self.fused = (len(set(self.nsample_list)) == 1
                      and len(set(len(m) for m in mlp_list)) == 1)
        if self.fused:
            self._kernel_params = [_pad_layers(_fuse_branch_layers(self.params))]
        else:
            self._kernel_params = [_pad_layers(layers) for layers in self.params]

    def _group(self, xyz, new_xyz, points, radius, nsample):
        """Neighbor grouping emitted directly in K-major [K, B, S, C] layout via
        a single flat cross-batch gather, so the kernel wrapper never transposes
        the big grouped tensor."""
        B, N, _ = xyz.shape
        S = new_xyz.shape[1]
        if self.knn:
            # TransitionDown in the spec: radius unused, take the K nearest points.
            dists = square_distance(new_xyz, xyz)
            group_idx = jnp.argsort(dists, axis=-1)[:, :, :nsample].astype(jnp.int32)
        else:
            group_idx = query_ball_point(radius, nsample, xyz, new_xyz)
        idx_kbs = jnp.transpose(group_idx, (2, 0, 1))                 # [K,B,S] (tiny)
        flat_idx = (idx_kbs
                    + (jnp.arange(B, dtype=jnp.int32) * N)[None, :, None]).reshape(-1)
        gxyz = jnp.take(xyz.reshape(B * N, 3), flat_idx, axis=0
                        ).reshape(nsample, B, S, 3)
        gxyz = gxyz - new_xyz[None]                                   # local coords
        if points is not None:
            d = points.shape[-1]
            gpts = jnp.take(points.reshape(B * N, d), flat_idx, axis=0
                            ).reshape(nsample, B, S, d)
            grouped = jnp.concatenate([gxyz, gpts], axis=-1)          # spec order
        else:
            grouped = gxyz
        return grouped.astype(jnp.float32)

    def __call__(self, xyz, points, seed_idx=None, fps_key=None, reference=False):
        """xyz: [B, N, 3]; points: [B, N, D] (channels-last, as the torch code
        actually consumes them). Returns (new_xyz [B,S,3], feats [B,S,D'])."""
        S = self.npoint
        if seed_idx is None:
            seed_idx = farthest_point_sample(xyz, S, fps_key)
        new_xyz = index_points(xyz, seed_idx)                         # [B,S,3]

        grouped_list = [
            self._group(xyz, new_xyz, points, r, k)                   # [K,B,S,C]
            for r, k in zip(self.radius_list, self.nsample_list)]

        if reference:                                                 # pure-JAX check
            feats = jnp.concatenate(
                [_ref_shared_mlp_max(g, layers)
                 for g, layers in zip(grouped_list, self.params)], axis=-1)
        elif self.fused:
            grouped = jnp.concatenate(grouped_list, axis=-1)          # [K,B,S,sum Cin]
            feats = shared_mlp_max_pallas(grouped, self._kernel_params[0])
        else:
            feats = jnp.concatenate(
                [shared_mlp_max_pallas(g, kp)
                 for g, kp in zip(grouped_list, self._kernel_params)], axis=-1)
        return new_xyz, feats


# ---------------------------------------- main ---------------------------------------

if __name__ == "__main__":
    key = jax.random.PRNGKey(0)
    k_xyz, k_pts, k_params, k_fps = jax.random.split(key, 4)

    B, N, D = 2, 32, 4            # batch, points, feature channels (in_channel)
    npoint = 10                   # B*npoint=20 -> exercises the padded-row mask path
    radius_list = [0.5, 1.0]
    nsample_list = [8, 8]         # equal K -> the two MSG branches fuse into one chain
    mlp_list = [[16, 32], [16, 32]]

    xyz = jax.random.normal(k_xyz, (B, N, 3), jnp.float32)
    points = jax.random.normal(k_pts, (B, N, D), jnp.float32)

    module = PointNetSetAbstractionMsgPallas(
        npoint, radius_list, nsample_list, D, mlp_list, k_params)

    new_xyz, feats = module(xyz, points, fps_key=k_fps)
    new_xyz, feats = jax.block_until_ready((new_xyz, feats))

    assert new_xyz.shape == (B, npoint, 3)
    assert feats.shape == (B, npoint, sum(m[-1] for m in mlp_list))
    assert bool(jnp.all(jnp.isfinite(feats)))

    # Pure-JAX reference with PyTorch semantics (incl. the conv bias, which the
    # kernel path absorbs exactly into the training-mode BatchNorm).  bf16
    # inter-layer activations in the kernel path cost ~0.4% relative error.
    _, feats_ref = module(xyz, points, fps_key=k_fps, reference=True)
    feats_ref = jax.block_until_ready(feats_ref)
    max_err = float(jnp.max(jnp.abs(feats - feats_ref)))
    assert bool(jnp.allclose(feats, feats_ref, atol=1e-1, rtol=1e-1)), max_err

    print("KERNEL_OK")
</pallas_src>

<mosaic_0001>
module attributes {stable_mosaic.version = 11 : i64} {
  func.func @kernel(%arg0: i32, %arg1: memref<32x128xbf16, #tpu.memory_space<vmem>>, %arg2: memref<128x128xbf16, #tpu.memory_space<vmem>>, %arg3: memref<32x128xbf16, #tpu.memory_space<vmem>>, %arg4: memref<1x2x128xf32, #tpu.memory_space<vmem>>) attributes {dimension_semantics = [#tpu.dimension_semantics<parallel>], iteration_bounds = array<i64: 8>, scalar_prefetch = 0 : i64, scratch_operands = 0 : i64, tpu.core_type = #tpu.core_type<tc>, window_params = [{transform_indices = @transform_0, window_bounds = array<i64: 32, 128>}, {pipeline_mode = #tpu.pipeline_mode<synchronous>, transform_indices = @transform_1, window_bounds = array<i64: 128, 128>}, {transform_indices = @transform_2, window_bounds = array<i64: 32, 128>}, {transform_indices = @transform_3, window_bounds = array<i64: 1, 2, 128>}]} {
    %c0 = arith.constant 0 : index
    %c0_0 = arith.constant 0 : index
    %0 = vector.load %arg1[%c0, %c0_0] : memref<32x128xbf16, #tpu.memory_space<vmem>>, vector<32x128xbf16>
    %c0_1 = arith.constant 0 : index
    %c0_2 = arith.constant 0 : index
    %1 = vector.load %arg2[%c0_1, %c0_2] : memref<128x128xbf16, #tpu.memory_space<vmem>>, vector<128x128xbf16>
    %cst = arith.constant dense<0.000000e+00> : vector<32x128xf32>
    %2 = tpu.matmul %0, %1, %cst {dimension_numbers = #tpu.dot_dimension_numbers<[1], [0], [0], [1], [0, 0, 1, 1], [], []>} : vector<32x128xbf16>, vector<128x128xbf16>, vector<32x128xf32> -> vector<32x128xf32>
    %3 = arith.truncf %2 : vector<32x128xf32> to vector<32x128xbf16>
    %c0_3 = arith.constant 0 : index
    %c0_4 = arith.constant 0 : index
    %4 = vector.load %arg3[%c0_3, %c0_4] : memref<32x128xbf16, #tpu.memory_space<vmem>>, vector<32x128xbf16>
    tpu.vector_store %arg3[%c0_3, %c0_4], %3 {strides = array<i32>} : memref<32x128xbf16, #tpu.memory_space<vmem>>, vector<32x128xbf16>,
    %c32_i32 = arith.constant 32 : i32
    %5 = arith.muli %arg0, %c32_i32 : i32
    %c32_i32_5 = arith.constant 32 : i32
    %c0_i32 = arith.constant 0 : i32
    %6 = arith.cmpi eq, %c32_i32_5, %c0_i32 : i32
    %c1_i32 = arith.constant 1 : i32
    %7 = arith.select %6, %c1_i32, %c32_i32_5 : i32
    %8 = arith.remsi %5, %7 : i32
    %c0_i32_6 = arith.constant 0 : i32
    %9 = arith.cmpi ne, %8, %c0_i32_6 : i32
    %c0_i32_7 = arith.constant 0 : i32
    %10 = arith.cmpi slt, %8, %c0_i32_7 : i32
    %c0_i32_8 = arith.constant 0 : i32
    %11 = arith.cmpi slt, %7, %c0_i32_8 : i32
    %12 = arith.xori %10, %11 : i1
    %13 = arith.andi %12, %9 : i1
    %14 = arith.addi %8, %7 : i32
    %15 = arith.select %13, %14, %8 : i32
    %16 = tpu.iota {dimensions = array<i32: 0>} : vector<32x1xi32>
    %17 = vector.broadcast %15 : i32 to vector<32x1xi32>
    %18 = arith.addi %17, %16 : vector<32x1xi32>
    %c20_i32 = arith.constant 20 : i32
    %19 = vector.broadcast %c20_i32 : i32 to vector<32x1xi32>
    %20 = arith.cmpi slt, %18, %19 : vector<32x1xi32>
    %cst_9 = arith.constant 0.000000e+00 : f32
    %21 = vector.shape_cast %20 : vector<32x1xi1> to vector<32x1xi1>
    %22 = vector.broadcast %21 : vector<32x1xi1> to vector<32x128xi1>
    %23 = vector.broadcast %cst_9 : f32 to vector<32x128xf32>
    %24 = arith.select %22, %2, %23 : vector<32x128xi1>, vector<32x128xf32>
    %c20_i32_10 = arith.constant 20 : i32
    %25 = arith.subi %c20_i32_10, %15 : i32
    %c0_i32_11 = arith.constant 0 : i32
    %c32_i32_12 = arith.constant 32 : i32
    %26 = arith.maxsi %c0_i32_11, %25 : i32
    %27 = arith.minsi %c32_i32_12, %26 : i32
    %28 = arith.sitofp %27 : i32 to f32
    %cst_13 = arith.constant dense<0.000000e+00> : vector<128xf32>
    %29 = vector.multi_reduction <add>, %24, %cst_13 [0] : vector<32x128xf32> to vector<128xf32>
    %30 = vector.shape_cast %29 : vector<128xf32> to vector<1x128xf32>
    %cst_14 = arith.constant 1.000000e+00 : f32
    %31 = arith.maximumf %28, %cst_14 : f32
    %32 = vector.broadcast %31 : f32 to vector<1x128xf32>
    %33 = arith.divf %30, %32 : vector<1x128xf32>
    %34 = vector.broadcast %33 : vector<1x128xf32> to vector<32x128xf32>
    %35 = arith.subf %24, %34 : vector<32x128xf32>
    %cst_15 = arith.constant 0.000000e+00 : f32
    %36 = vector.shape_cast %20 : vector<32x1xi1> to vector<32x1xi1>
    %37 = vector.broadcast %36 : vector<32x1xi1> to vector<32x128xi1>
    %38 = vector.broadcast %cst_15 : f32 to vector<32x128xf32>
    %39 = arith.select %37, %35, %38 : vector<32x128xi1>, vector<32x128xf32>
    %40 = arith.mulf %39, %39 : vector<32x128xf32>
    %cst_16 = arith.constant dense<0.000000e+00> : vector<128xf32>
    %41 = vector.multi_reduction <add>, %40, %cst_16 [0] : vector<32x128xf32> to vector<128xf32>
    %42 = vector.shape_cast %41 : vector<128xf32> to vector<1x128xf32>
    %43 = tpu.concatenate %30, %42 in 0 : vector<1x128xf32>, vector<1x128xf32> -> vector<2x128xf32>
    %44 = vector.shape_cast %43 : vector<2x128xf32> to vector<1x2x128xf32>
    %c0_17 = arith.constant 0 : index
    %c0_18 = arith.constant 0 : index
    %c0_19 = arith.constant 0 : index
    %45 = vector.load %arg4[%c0_17, %c0_18, %c0_19] : memref<1x2x128xf32, #tpu.memory_space<vmem>>, vector<1x2x128xf32>
    tpu.vector_store %arg4[%c0_17, %c0_18, %c0_19], %44 {strides = array<i32>} : memref<1x2x128xf32, #tpu.memory_space<vmem>>, vector<1x2x128xf32>,
    return
  }
  func.func @transform_0(%arg0: i32) -> (i32, i32) {
    %c0_i32 = arith.constant 0 : i32
    %c0_i32_0 = arith.constant 0 : i32
    return %arg0, %c0_i32 : i32, i32
  }
  func.func @transform_1(%arg0: i32) -> (i32, i32) {
    %c0_i32 = arith.constant 0 : i32
    %c0_i32_0 = arith.constant 0 : i32
    %c0_i32_1 = arith.constant 0 : i32
    return %c0_i32, %c0_i32_0 : i32, i32
  }
  func.func @transform_2(%arg0: i32) -> (i32, i32) {
    %c0_i32 = arith.constant 0 : i32
    %c0_i32_0 = arith.constant 0 : i32
    return %arg0, %c0_i32 : i32, i32
  }
  func.func @transform_3(%arg0: i32) -> (i32, i32, i32) {
    %c0_i32 = arith.constant 0 : i32
    %c0_i32_0 = arith.constant 0 : i32
    %c0_i32_1 = arith.constant 0 : i32
    return %arg0, %c0_i32, %c0_i32_0 : i32, i32, i32
  }
}

</mosaic_0001>

<llo_original>
// kernel: tpu_custom_call.1
$region0: #{tpu_custom_call.1}
  #allocation0 [shape = 'u32[]', space=smem, size = 0x4, offset = 0x4, fixed_abs, tag = 'smem constant byte address 0x4 - core index']
  #allocation1 [shape = 'u32[144,128]{1,0:T(1,128)}', space=vmem, size = 0x12000, scoped, tag = 'internal scratch']
  %s0 = inlined_call_operand.hbm [shape: bf16[256,128], index: 0, kind: input, shape index: {}]
  %s1 = inlined_call_operand.hbm [shape: bf16[128,128], index: 1, kind: input, shape index: {}]
  %s2 = inlined_call_operand.hbm [shape: bf16[256,128], index: 2, kind: output, shape index: {0}]
  %s3 = inlined_call_operand.hbm [shape: f32[8,2,128], index: 3, kind: output, shape index: {1}]
  %4 = xla_tuple %s2, %s3
  %s5 = sld [smem:[#allocation0]]
  $region57: #{tpu_custom_call.1} parent=0
    _
  %s7 = ssub.s32 1, %s5
  %s8 = scalar_select 0, %s7, %s5
  $region1: #{tpu_custom_call.1} parent=0
    #allocation2 [shape = 'u8[16384]{0}', space=vmem, size = 0x4000, scoped, tag = 'input window, operand 0']
    #allocation3 [shape = 's32[2]{0}', space=sflag, size = 0x8, scoped, tag = 'scoped memory for tpu_custom_call.1']
    #allocation4 [shape = 's32[2]{0}', space=sflag, size = 0x8, scoped, tag = 'scoped memory for tpu_custom_call.1']
    #allocation5 [shape = 'u8[32768]{0}', space=vmem, size = 0x8000, scoped, tag = 'input window, operand 1, single buffered']
    #allocation6 [shape = 's32[1]{0}', space=sflag, size = 0x4, scoped, tag = 'scoped memory for tpu_custom_call.1']
    #allocation7 [shape = 'u8[16384]{0}', space=vmem, size = 0x4000, scoped, tag = 'output window, operand 0']
    #allocation8 [shape = 'u8[2048]{0}', space=vmem, size = 0x800, scoped, tag = 'output window, operand 1']
    #allocation9 [shape = 's32[2]{0}', space=sflag, size = 0x8, scoped, tag = 'scoped memory for tpu_custom_call.1']
    %9 = vsyncpa [#allocation3], 0
    %s10 = scalar_lea.sflag [#allocation3], 1
    %11 = vsyncpa %s10, 0
    %12 = vsyncpa [#allocation6], 0
    %13 = vsyncpa [#allocation4], 0
    %s14 = scalar_lea.sflag [#allocation4], 1
    %15 = vsyncpa %s14, 0
    %16 = vsyncpa [#allocation9], 0
    %s17 = scalar_lea.sflag [#allocation9], 1
    %18 = vsyncpa %s17, 0
    loop: start=0, step=1, limit=10
    $region2: #{tpu_custom_call.1} parent=1 // loop_pre_header
      _
    $region3: #{tpu_custom_call.1} parent=1 // loop_header
      %s20 = sphi 0, %s24
      %p21 = scmp.ge.s32.totalorder %s20, 10
      %s30 = sphi 0, %s32
      %s33 = sphi 0, %s30
      %s34 = sphi 0, %s33
      %s50 = sphi 0, %s34
      %s54 = sphi 0, %s54
      %s56 = sphi 0, %s54
      %s57 = sphi 0, %s56
      %s71 = sphi 0, %s57
      %s77 = sphi 0, %s79
      %s80 = sphi 0, %s77
      %s81 = sphi 0, %s80
      %s97 = sphi 0, %s81
      %s103 = sphi 0, %s105
      %s106 = sphi 0, %s103
      %s107 = sphi 0, %s106
      %s123 = sphi 0, %s107
    $region4: #{tpu_custom_call.1} parent=1 // loop_header_branch
      %23 = sbr.rel (%p21) target = $region8
    $region5: #{tpu_custom_call.1} parent=1 // loop_body
      %s25 = ssub.s32 %s20, 1
      %s26 = ssub.s32 %s20, 2
      %s27 = sadd.s32 %s20, 1
      %s28 = ssub.s32 %s20, %s27
      %p29 = scmp.eq.s32.totalorder %s28, 0
      %s31 = sadd.s32 %s30, 1
      %s32 = scalar_select %p29, %s30, %s31
      %p35 = pneg %p29
      %p36 = scmp.eq.s32.totalorder %s20, 7
      %p37 = por %p35, %p36
      %p38 = scmp.ne.s32.totalorder %s30, %s33
      %p39 = scmp.eq.s32.totalorder %s20, 0
      %p40 = por %p38, %p39
      %p41 = scmp.ne.s32.totalorder %s30, %s33
      %p42 = scmp.eq.s32.totalorder %s25, 7
      %p43 = por %p41, %p42
      %p44 = scmp.ne.s32.totalorder %s33, %s34
      %p45 = scmp.eq.s32.totalorder %s25, 0
      %p46 = por %p44, %p45
      %p47 = scmp.ne.s32.totalorder %s33, %s34
      %p48 = scmp.eq.s32.totalorder %s26, 7
      %p49 = por %p47, %p48
      %p51 = scmp.ne.s32.totalorder %s34, %s50
      %p52 = scmp.eq.s32.totalorder %s26, 0
      %p53 = por %p51, %p52
      %s55 = sadd.s32 %s54, 1
      %p58 = scmp.eq.s32.totalorder %s20, 7
      %p59 = scmp.ne.s32.totalorder %s54, %s56
      %p60 = scmp.eq.s32.totalorder %s20, 0
      %p61 = por %p59, %p60
      %p62 = scmp.ne.s32.totalorder %s54, %s56
      %p63 = scmp.eq.s32.totalorder %s25, 7
      %p64 = por %p62, %p63
      %p65 = scmp.ne.s32.totalorder %s56, %s57
      %p66 = scmp.eq.s32.totalorder %s25, 0
      %p67 = por %p65, %p66
      %p68 = scmp.ne.s32.totalorder %s56, %s57
      %p69 = scmp.eq.s32.totalorder %s26, 7
      %p70 = por %p68, %p69
      %p72 = scmp.ne.s32.totalorder %s57, %s71
      %p73 = scmp.eq.s32.totalorder %s26, 0
      %p74 = por %p72, %p73
      %s75 = ssub.s32 %s20, %s27
      %p76 = scmp.eq.s32.totalorder %s75, 0
      %s78 = sadd.s32 %s77, 1
      %s79 = scalar_select %p76, %s77, %s78
      %p82 = pneg %p76
      %p83 = scmp.eq.s32.totalorder %s20, 7
      %p84 = por %p82, %p83
      %p85 = scmp.ne.s32.totalorder %s77, %s80
      %p86 = scmp.eq.s32.totalorder %s20, 0
      %p87 = por %p85, %p86
      %p88 = scmp.ne.s32.totalorder %s77, %s80
      %p89 = scmp.eq.s32.totalorder %s25, 7
      %p90 = por %p88, %p89
      %p91 = scmp.ne.s32.totalorder %s80, %s81
      %p92 = scmp.eq.s32.totalorder %s25, 0
      %p93 = por %p91, %p92
      %p94 = scmp.ne.s32.totalorder %s80, %s81
      %p95 = scmp.eq.s32.totalorder %s26, 7
      %p96 = por %p94, %p95
      %p98 = scmp.ne.s32.totalorder %s81, %s97
      %p99 = scmp.eq.s32.totalorder %s26, 0
      %p100 = por %p98, %p99
      %s101 = ssub.s32 %s20, %s27
      %p102 = scmp.eq.s32.totalorder %s101, 0
      %s104 = sadd.s32 %s103, 1
      %s105 = scalar_select %p102, %s103, %s104
      %p108 = pneg %p102
      %p109 = scmp.eq.s32.totalorder %s20, 7
      %p110 = por %p108, %p109
      %p111 = scmp.ne.s32.totalorder %s103, %s106
      %p112 = scmp.eq.s32.totalorder %s20, 0
      %p113 = por %p111, %p112
      %p114 = scmp.ne.s32.totalorder %s103, %s106
      %p115 = scmp.eq.s32.totalorder %s25, 7
      %p116 = por %p114, %p115
      %p117 = scmp.ne.s32.totalorder %s106, %s107
      %p118 = scmp.eq.s32.totalorder %s25, 0
      %p119 = por %p117, %p118
      %p120 = scmp.ne.s32.totalorder %s106, %s107
      %p121 = scmp.eq.s32.totalorder %s26, 7
      %p122 = por %p120, %p121
      %p124 = scmp.ne.s32.totalorder %s107, %s123
      %p125 = scmp.eq.s32.totalorder %s26, 0
      %p126 = por %p124, %p125
      %p127 = scmp.le.s32.totalorder 1, %s20
      %p128 = scmp.lt.s32.totalorder %s20, 9
      %p129 = pnand %p127, %p128
      %p130 = pneg %p129
      // Predicated region
      $region9: #{tpu_custom_call.1} parent=5 // pred_check
        _
      $region10: #{tpu_custom_call.1} parent=5 // pred_check_branch
        %132 = sbr.rel (%p129) target = $region12
      $region11: #{tpu_custom_call.1} parent=5 // pred_region
        %s133 = ssub.s32 %s20, 1
        // Predicated region
        $region13: #{tpu_custom_call.1} parent=11 // pred_check
          %p134 = pneg %p67
        $region14: #{tpu_custom_call.1} parent=11 // pred_check_branch
          %136 = sbr.rel (%p134) target = $region16
        $region15: #{tpu_custom_call.1} parent=11 // pred_region
          %s138 = ssub.s32 1024, 1024
          %139 = vsyncadd [#allocation6], %s138
          %s140 = sshll.u32 [#allocation5], 4
          %s141 = int_to_ptr.vmem [resolvable:$true] %s140
          %146 = dma.hbm_to_vmem [thread:$0]  %s1, 1024, %s141, [#allocation6], 64, 64, 4
        $region16: #{tpu_custom_call.1} parent=11 // pred_fallthru
          _
      $region12: #{tpu_custom_call.1} parent=5 // pred_fallthru
        _
      %p147 = scmp.lt.s32.totalorder %s20, 8
      // Predicated region
      $region17: #{tpu_custom_call.1} parent=5 // pred_check
        %p148 = pneg %p147
      $region18: #{tpu_custom_call.1} parent=5 // pred_check_branch
        %150 = sbr.rel (%p148) target = $region20
      $region19: #{tpu_custom_call.1} parent=5 // pred_region
        // Predicated region
        $region21: #{tpu_custom_call.1} parent=19 // pred_check
          %p151 = pneg %p40
        $region22: #{tpu_custom_call.1} parent=19 // pred_check_branch
          %153 = sbr.rel (%p151) target = $region24
        $region23: #{tpu_custom_call.1} parent=19 // pred_region
          %s154 = sand.u32 %s30, 1
          %s155 = scalar_lea.sflag [#allocation3], %s154
          %s156 = sand.u32 %s30, 1
          %s157 = smul.addr %s156, 16
          %s158 = scalar_lea.vmem [#allocation2], %s157
          %s159 = smul.u32 4, %s20
          %s161 = ssub.s32 256, 256
          %162 = vsyncadd %s155, %s161
          %s163 = smul.addr %s159, 64
          %s164 = scalar_lea.hbm %s0, %s163
          %s165 = sshll.u32 %s158, 4
          %s166 = int_to_ptr.vmem [resolvable:$true] %s165
          %171 = dma.hbm_to_vmem [thread:$0]  %s164, 256, %s166, %s155, 64, 64, 4
        $region24: #{tpu_custom_call.1} parent=19 // pred_fallthru
          _
      $region20: #{tpu_custom_call.1} parent=5 // pred_fallthru
        _
      %p172 = scmp.le.s32.totalorder 1, %s20
      %p173 = scmp.lt.s32.totalorder %s20, 9
      %p174 = pnand %p172, %p173
      %p175 = pneg %p174
      // Predicated region
      $region25: #{tpu_custom_call.1} parent=5 // pred_check
        _
      $region26: #{tpu_custom_call.1} parent=5 // pred_check_branch
        %177 = sbr.rel (%p174) target = $region28
      $region27: #{tpu_custom_call.1} parent=5 // pred_region
        %s178 = ssub.s32 %s20, 1
        %s179 = sand.u32 %s33, 1
        %s180 = scalar_lea.sflag [#allocation3], %s179
        %s181 = sand.u32 %s33, 1
        %s182 = smul.addr %s181, 16
        %s183 = scalar_lea.vmem [#allocation2], %s182
        // Predicated region
        $region29: #{tpu_custom_call.1} parent=27 // pred_check
          %p184 = pneg %p46
        $region30: #{tpu_custom_call.1} parent=27 // pred_check_branch
          %186 = sbr.rel (%p184) target = $region32
        $region31: #{tpu_custom_call.1} parent=27 // pred_region
          %187 = dma.done %s180, 256
        $region32: #{tpu_custom_call.1} parent=27 // pred_fallthru
          _
        // Predicated region
        $region33: #{tpu_custom_call.1} parent=27 // pred_check
          %p188 = pneg %p67
        $region34: #{tpu_custom_call.1} parent=27 // pred_check_branch
          %190 = sbr.rel (%p188) target = $region36
        $region35: #{tpu_custom_call.1} parent=27 // pred_region
          %191 = dma.done [#allocation6], 1024
        $region36: #{tpu_custom_call.1} parent=27 // pred_fallthru
          _
        %s192 = sand.u32 %s33, 1
        %s193 = scalar_lea.sflag [#allocation3], %s192
        %s194 = sand.u32 %s33, 1
        %s195 = smul.addr %s194, 16
        %s196 = scalar_lea.vmem [#allocation2], %s195
        %p197 = pneg %p46
        %p198 = pneg %p43
        %p199 = pneg %p67
        %p200 = pneg %p64
        %p201 = pneg %p93
        %p202 = pneg %p90
        %s203 = sand.u32 %s80, 1
        %s204 = scalar_lea.sflag [#allocation4], %s203
        %s205 = sand.u32 %s80, 1
        %s206 = smul.addr %s205, 16
        %s207 = scalar_lea.vmem [#allocation7], %s206
        %p208 = pneg %p119
        %p209 = pneg %p116
        %s210 = sand.u32 %s106, 1
        %s211 = scalar_lea.sflag [#allocation9], %s210
        %s212 = sand.u32 %s106, 1
        %s213 = smul.addr %s212, 2
        %s214 = scalar_lea.vmem [#allocation8], %s213
        %s215 = smul.u32 4, %s25
        %s216 = smul.u32 4, %s25
        %v218 = vld [vmem:[%s183] sm:$0xf]
        %v219 = vld [vmem:[%s183 + $0x4] sm:$0xf]
        %v220 = vld [vmem:[%s183 + $0x8] sm:$0xf]
        %v221 = vld [vmem:[%s183 + $0xc] sm:$0xf]
        %v222 = vld [vmem:[#allocation5] sm:$0xf]
        %v223 = vld [vmem:[#allocation5 + $0x4] sm:$0xf]
        %v224 = vld [vmem:[#allocation5 + $0x8] sm:$0xf]
        %v225 = vld [vmem:[#allocation5 + $0xc] sm:$0xf]
        %v226 = vld [vmem:[#allocation5 + $0x10] sm:$0xf]
        %v227 = vld [vmem:[#allocation5 + $0x14] sm:$0xf]
        %v228 = vld [vmem:[#allocation5 + $0x18] sm:$0xf]
        %v229 = vld [vmem:[#allocation5 + $0x1c] sm:$0xf]
        %v230 = vld [vmem:[#allocation5 + $0x20] sm:$0xf]
        %v231 = vld [vmem:[#allocation5 + $0x24] sm:$0xf]
        %v232 = vld [vmem:[#allocation5 + $0x28] sm:$0xf]
        %v233 = vld [vmem:[#allocation5 + $0x2c] sm:$0xf]
        %v234 = vld [vmem:[#allocation5 + $0x30] sm:$0xf]
        %v235 = vld [vmem:[#allocation5 + $0x34] sm:$0xf]
        %v236 = vld [vmem:[#allocation5 + $0x38] sm:$0xf]
        %v237 = vld [vmem:[#allocation5 + $0x3c] sm:$0xf]
        %v242 = vunpack.c.l.b16 %v218
        %v243 = vunpack.c.l.b16 %v219
        %v244 = vunpack.c.l.b16 %v220
        %v245 = vunpack.c.l.b16 %v221
        %v246 = vpack.c.b16 %v243, %v242
        %v247 = vpack.c.b16 %v245, %v244
        %v266 = vunpack.c.l.b16 %v222
        %v267 = vunpack.c.l.b16 %v223
        %v268 = vunpack.c.l.b16 %v224
        %v269 = vunpack.c.l.b16 %v225
        %v270 = vunpack.c.l.b16 %v226
        %v271 = vunpack.c.l.b16 %v227
        %v272 = vunpack.c.l.b16 %v228
        %v273 = vunpack.c.l.b16 %v229
        %v274 = vunpack.c.l.b16 %v230
        %v275 = vunpack.c.l.b16 %v231
        %v276 = vunpack.c.l.b16 %v232
        %v277 = vunpack.c.l.b16 %v233
        %v278 = vunpack.c.l.b16 %v234
        %v279 = vunpack.c.l.b16 %v235
        %v280 = vunpack.c.l.b16 %v236
        %v281 = vunpack.c.l.b16 %v237
        %v282 = vpack.c.b16 %v267, %v266
        %v283 = vpack.c.b16 %v269, %v268
        %v284 = vpack.c.b16 %v271, %v270
        %v285 = vpack.c.b16 %v273, %v272
        %v286 = vpack.c.b16 %v275, %v274
        %v287 = vpack.c.b16 %v277, %v276
        %v288 = vpack.c.b16 %v279, %v278
        %v289 = vpack.c.b16 %v281, %v280
        %298 = vmatprep.subr.bf16.mxu0 0
        %299 = vmatpush1.bf16.msra.mxu0 %v282
        %300 = vmatprep.subr.bf16.mxu0 0
        %301 = vmatpush1.bf16.msra.mxu0 %v283
        %302 = vmatprep.subr.bf16.mxu0 0
        %303 = vmatpush1.bf16.msra.mxu0 %v284
        %304 = vmatprep.subr.bf16.mxu0 0
        %305 = vmatpush1.bf16.msra.mxu0 %v285
        %306 = vmatprep.subr.bf16.mxu0 0
        %307 = vmatpush1.bf16.msra.mxu0 %v286
        %308 = vmatprep.subr.bf16.mxu0 0
        %309 = vmatpush1.bf16.msra.mxu0 %v287
        %310 = vmatprep.subr.bf16.mxu0 0
        %311 = vmatpush1.bf16.msra.mxu0 %v288
        %312 = vmatprep.subr.bf16.mxu0 0
        %313 = vmatpush1.bf16.msra.mxu0 %v289
        %314 = vmatprep.subr.bf16.mxu0 0
        %315 = vmatpush1.bf16.msra.mxu0 0
        %316 = vmatprep.subr.bf16.mxu0 0
        %317 = vmatpush1.bf16.msra.mxu0 0
        %318 = vmatprep.subr.bf16.mxu0 0
        %319 = vmatpush1.bf16.msra.mxu0 0
        %320 = vmatprep.subr.bf16.mxu0 0
        %321 = vmatpush1.bf16.msra.mxu0 0
        %322 = vmatprep.subr.bf16.mxu0 0
        %323 = vmatpush1.bf16.msra.mxu0 0
        %324 = vmatprep.subr.bf16.mxu0 0
        %325 = vmatpush1.bf16.msra.mxu0 0
        %326 = vmatprep.subr.bf16.mxu0 0
        %327 = vmatpush1.bf16.msra.mxu0 0
        %328 = vmatprep.subr.bf16.mxu0 0
        %329 = vmatpush1.bf16.msra.mxu0 0
        %330 = vmatprep.mubr.bf16.mxu0 0
        %331 = vmatmul.mubr.bf16.gmra.mrb[0].mxu0 %v246
        %v332 = vpop.f32.mrb[0].mxu0
        %v333 = vadd.f32 0.0, %v332
        %v334 = vpop.f32.mrb[0].mxu0
        %v335 = vpop.f32.mrb[0].mxu0
        %v336 = vadd.f32 0.0, %v335
        %v337 = vpop.f32.mrb[0].mxu0
        %338 = vmatprep.mubr.bf16.mxu0 0
        %339 = vmatmul.mubr.bf16.gmra.mrb[0].mxu0 %v247
        %v340 = vpop.f32.mrb[0].mxu0
        %v341 = vadd.f32 0.0, %v340
        %v342 = vpop.f32.mrb[0].mxu0
        %v343 = vpop.f32.mrb[0].mxu0
        %v344 = vadd.f32 0.0, %v343
        %v345 = vpop.f32.mrb[0].mxu0
        %346 = vdwg.mxu0
        %v347 = vpack.c.bf16 %v336, %v333
        %v348 = vpack.c.bf16 %v344, %v341
        %v351 = vunpack.c.l.b16 %v347
        %v352 = vunpack.c.h.b16 %v347
        %v353 = vunpack.c.l.b16 %v348
        %v354 = vunpack.c.h.b16 %v348
        %v355 = vpack.c.b16 %v351, %v351
        %v356 = vpack.c.b16 %v352, %v352
        %v357 = vpack.c.b16 %v353, %v353
        %v358 = vpack.c.b16 %v354, %v354
        %363 = vst [vmem:[%s207] sm:$0xf] %v355
        %364 = vst [vmem:[%s207 + $0x4] sm:$0xf] %v356
        %365 = vst [vmem:[%s207 + $0x8] sm:$0xf] %v357
        %366 = vst [vmem:[%s207 + $0xc] sm:$0xf] %v358
        %s367 = smul.u32 %s25, 32
        %p368 = scmp.lt.s32.totalorder %s367, 0
        %s369 = ssub.s32 0, %s367
        %s370 = scalar_select %p368, %s369, %s367
        %s371 = sand.u32 %s370, 31
        %s372 = ssub.s32 0, %s371
        %s373 = scalar_select %p368, %s372, %s371
        %p374 = scmp.ne.s32.totalorder %s373, 0
        %p375 = scmp.lt.s32.totalorder %s373, 0
        %p376 = pnand %p375, %p374
        %p377 = pneg %p376
        %s378 = sadd.s32 %s373, 32
        %s379 = scalar_select %p377, %s378, %s373
        %v380 = vlaneseq
        %v381 = vshrl.u32 %v380, 7
        %v382 = vadd.s32 %v381, 8
        %v383 = vadd.s32 %v381, 16
        %v384 = vadd.s32 %v381, 24
        %v385 = vstv %s379
        %v386 = vadd.s32 %v385, %v381
        %v387 = vadd.s32 %v385, %v382
        %v388 = vadd.s32 %v385, %v383
        %v389 = vadd.s32 %v385, %v384
        %vm390 = vcmp.lt.s32.totalorder %v386, 20
        %vm391 = vcmp.lt.s32.totalorder %v387, 20
        %vm392 = vcmp.lt.s32.totalorder %v388, 20
        %vm393 = vcmp.lt.s32.totalorder %v389, 20
        %v394 = vsel %vm390, 1, 0
        %v395 = vsel %vm391, 1, 0
        %v396 = vsel %vm392, 1, 0
        %v397 = vsel %vm393, 1, 0
        %vm398 = vcmp.eq.s32.totalorder %v394, 1
        %vm399 = vcmp.eq.s32.totalorder %v395, 1
        %vm400 = vcmp.eq.s32.totalorder %v396, 1
        %vm401 = vcmp.eq.s32.totalorder %v397, 1
        %v402 = vsel %vm398, %v333, 0.0
        %v403 = vsel %vm399, %v336, 0.0
        %v404 = vsel %vm400, %v341, 0.0
        %v405 = vsel %vm401, %v344, 0.0
        %s406 = ssub.s32 20, %s379
        %p407 = scmp.gt.s32.totalorder %s406, 0
        %s408 = scalar_select %p407, %s406, 0
        %p409 = scmp.lt.s32.totalorder %s408, 32
        %s410 = scalar_select %p409, %s408, 32
        %s411 = scvt.s32.f32 %s410
        %v412 = vadd.f32 %v402, %v403
        %v413 = vadd.f32 %v412, %v404
        %v414 = vadd.f32 %v413, %v405
        %v415 = vrot.slane %v414, 4
        %v416 = vadd.f32 %v414, %v415
        %v417 = vrot.slane %v416, 2
        %v418 = vadd.f32 %v416, %v417
        %v419 = vrot.slane %v418, 1
        %v420 = vadd.f32 %v418, %v419
        %s421 = smax.f32 %s411, 1.0
        %v422 = vstv %s421
        %v423 = vrcp.pop %v422
        %v424 = vmul.f32 %v420, %v423
        %v425 = vsub.f32 %v402, %v424
        %v426 = vsub.f32 %v403, %v424
        %v427 = vsub.f32 %v404, %v424
        %v428 = vsub.f32 %v405, %v424
        %v429 = vsel %vm398, %v425, 0.0
        %v430 = vsel %vm399, %v426, 0.0
        %v431 = vsel %vm400, %v427, 0.0
        %v432 = vsel %vm401, %v428, 0.0
        %v433 = vmul.f32 %v429, %v429
        %v434 = vmul.f32 %v430, %v430
        %v435 = vmul.f32 %v431, %v431
        %v436 = vmul.f32 %v432, %v432
        %v437 = vadd.f32 %v433, %v434
        %v438 = vadd.f32 %v437, %v435
        %v439 = vadd.f32 %v438, %v436
        %v440 = vrot.slane %v439, 4
        %v441 = vadd.f32 %v439, %v440
        %v442 = vrot.slane %v441, 2
        %v443 = vadd.f32 %v441, %v442
        %v444 = vrot.slane %v443, 1
        %v445 = vadd.f32 %v443, %v444
        %vm446 = vcmask 1040384
        %v447 = vsel %vm446, %v420, %v445
        %448 = vst [vmem:[%s214] sm:$0x3] %v447
        %s449 = sand.u32 %s80, 1
        %s450 = scalar_lea.sflag [#allocation4], %s449
        %s451 = sand.u32 %s80, 1
        %s452 = smul.addr %s451, 16
        %s453 = scalar_lea.vmem [#allocation7], %s452
        %s454 = sand.u32 %s106, 1
        %s455 = scalar_lea.sflag [#allocation9], %s454
        %s456 = sand.u32 %s106, 1
        %s457 = smul.addr %s456, 2
        %s458 = scalar_lea.vmem [#allocation8], %s457
        // Predicated region
        $region37: #{tpu_custom_call.1} parent=27 // pred_check
          %p459 = pneg %p90
        $region38: #{tpu_custom_call.1} parent=27 // pred_check_branch
          %461 = sbr.rel (%p459) target = $region40
        $region39: #{tpu_custom_call.1} parent=27 // pred_region
          %s462 = smul.u32 4, %s25
          %s464 = ssub.s32 256, 256
          %465 = vsyncadd %s450, %s464
          %s466 = smul.addr %s462, 64
          %s467 = scalar_lea.hbm %s2, %s466
          %s468 = sshll.u32 %s453, 4
          %s469 = int_to_ptr.vmem [resolvable:$true] %s468
          %474 = dma.vmem_to_hbm [thread:$0]  %s469, 256, %s467, %s450, 64, 64, 4
        $region40: #{tpu_custom_call.1} parent=27 // pred_fallthru
          _
        // Predicated region
        $region41: #{tpu_custom_call.1} parent=27 // pred_check
          %p475 = pneg %p116
        $region42: #{tpu_custom_call.1} parent=27 // pred_check_branch
          %477 = sbr.rel (%p475) target = $region44
        $region43: #{tpu_custom_call.1} parent=27 // pred_region
          %s479 = ssub.s32 32, 32
          %480 = vsyncadd %s455, %s479
          %s481 = smul.addr %s25, 32
          %s482 = scalar_lea.hbm %s3, %s481
          %s484 = sshll.u32 %s458, 4
          %s485 = int_to_ptr.vmem [resolvable:$true] %s484
          %487 = dma.vmem_to_hbm [thread:$0]  %s485, 32, %s482, %s455
        $region44: #{tpu_custom_call.1} parent=27 // pred_fallthru
          _
      $region28: #{tpu_custom_call.1} parent=5 // pred_fallthru
        _
      %p488 = scmp.le.s32.totalorder 2, %s20
      // Predicated region
      $region45: #{tpu_custom_call.1} parent=5 // pred_check
        %p489 = pneg %p488
      $region46: #{tpu_custom_call.1} parent=5 // pred_check_branch
        %491 = sbr.rel (%p489) target = $region48
      $region47: #{tpu_custom_call.1} parent=5 // pred_region
        %s492 = ssub.s32 %s20, 2
        // Predicated region
        $region49: #{tpu_custom_call.1} parent=47 // pred_check
          %p493 = pneg %p96
        $region50: #{tpu_custom_call.1} parent=47 // pred_check_branch
          %495 = sbr.rel (%p493) target = $region52
        $region51: #{tpu_custom_call.1} parent=47 // pred_region
          %s496 = sand.u32 %s81, 1
          %s497 = scalar_lea.sflag [#allocation4], %s496
          %s498 = sand.u32 %s81, 1
          %s499 = smul.addr %s498, 16
          %s500 = scalar_lea.vmem [#allocation7], %s499
          %501 = dma.done %s497, 256
        $region52: #{tpu_custom_call.1} parent=47 // pred_fallthru
          _
        // Predicated region
        $region53: #{tpu_custom_call.1} parent=47 // pred_check
          %p502 = pneg %p122
        $region54: #{tpu_custom_call.1} parent=47 // pred_check_branch
          %504 = sbr.rel (%p502) target = $region56
        $region55: #{tpu_custom_call.1} parent=47 // pred_region
          %s505 = sand.u32 %s107, 1
          %s506 = scalar_lea.sflag [#allocation9], %s505
          %s507 = sand.u32 %s107, 1
          %s508 = smul.addr %s507, 2
          %s509 = scalar_lea.vmem [#allocation8], %s508
          %510 = dma.done %s506, 32
        $region56: #{tpu_custom_call.1} parent=47 // pred_fallthru
          _
      $region48: #{tpu_custom_call.1} parent=5 // pred_fallthru
        _
    $region6: #{tpu_custom_call.1} parent=1 // loop_footer
      %s24 = sadd.s32 1, %s20
    $region7: #{tpu_custom_call.1} parent=1 // loop_footer_branch
      %19 = sbr.rel target = $region3
    $region8: #{tpu_custom_call.1} parent=1 // loop_exit
      _
    %511 = vsyncpa [#allocation3], 1
    %s512 = scalar_lea.sflag [#allocation3], 1
    %513 = vsyncpa %s512, 1
    %514 = vsyncpa [#allocation6], 1
    %515 = vsyncpa [#allocation4], 1
    %s516 = scalar_lea.sflag [#allocation4], 1
    %517 = vsyncpa %s516, 1
    %518 = vsyncpa [#allocation9], 1
    %s519 = scalar_lea.sflag [#allocation9], 1
    %520 = vsyncpa %s519, 1

</llo_original>
